<compile_context>
chip_gen: v6e
topology: v6e:2x2x1
jax: 0.10.0
libtpu: 0.0.40
codegen_flags: <defaults>
</compile_context>

<pallas_src>
import functools

import jax
import jax.numpy as jnp
import numpy as np
from jax.experimental import pallas as pl
from jax.experimental.pallas import tpu as pltpu


def _vmem_capacity_bytes():
    """Physical per-core VMEM; conservative (v7x) fallback if the query fails."""
    try:
        cap = getattr(pltpu.get_tpu_info(), "vmem_capacity_bytes", None)
        if cap:
            return int(cap)
    except Exception:
        pass
    return 64 << 20


def _choose_row_tile(H, W, C, D, itemsize, vmem_cap, min_row_tiles):
    """Pick a row tile TH (divisor of H with TH*W % 128 == 0).

    The double-buffered pipeline footprint must fit well inside physical VMEM;
    among legal tiles prefer the largest under a soft output-block budget that
    still yields >= min_row_tiles grid steps (megacore occupancy).
    Returns None when no lane-aligned row tile fits (caller pads W instead).
    """
    def out_block(th):
        return C * D * th * W * itemsize

    def pipeline_bytes(th):  # double-buffered: 2 inputs + 1 output
        return 2 * (2 * C * th * W + C * D * th * W) * itemsize

    cands = [th for th in range(1, H + 1)
             if H % th == 0 and (th * W) % 128 == 0]
    legal = [th for th in cands if pipeline_bytes(th) <= int(0.7 * vmem_cap)]
    if not legal:
        return None

    # Bigger tiles amortize the ~0.35us/step overhead; allow larger blocks on
    # 128 MiB parts (v5e/v6e) than on 64 MiB v7x.
    soft = 16 << 20 if vmem_cap > (80 << 20) else 8 << 20
    pref = [th for th in legal if out_block(th) <= soft and H // th >= min_row_tiles]
    if pref:
        return max(pref)
    pref = [th for th in legal if out_block(th) <= soft]
    if pref:
        return max(pref)
    return min(legal)


def _diff_volume_kernel(left_ref, right_ref, out_ref, *, width, num_disp, group):
    # left_ref / right_ref : (1, C, F) row-aligned flat tiles, F = TH * W
    # out_ref              : (1, C, D, F)
    n_chan = left_ref.shape[1]
    F = left_ref.shape[2]
    out_dtype = out_ref.dtype

    # Hoisted once per grid step: (lane % W) - sublane.  The validity mask of a
    # whole disparity group [d0, d0+group) is then a single compare against d0.
    lane = jax.lax.broadcasted_iota(jnp.int32, (group, F), 1)
    sub = jax.lax.broadcasted_iota(jnp.int32, (group, F), 0)
    w_minus_j = lane % width - sub

    # TODO(synk): for very large C * max_disp, turn these static loops into
    # lax.fori_loop (dynamic channel index / dynamic-shift strided roll) to
    # bound unrolled code size.
    for c in range(n_chan):
        lb = jnp.broadcast_to(left_ref[0, c:c + 1, :], (group, F))
        rb = jnp.broadcast_to(right_ref[0, c:c + 1, :], (group, F))
        for d0 in range(0, num_disp, group):
            g = min(group, num_disp - d0)
            if d0 >= width:
                # Every column is masked once d >= W: zero-fill and move on.
                out_ref[0, c, d0:d0 + g, :] = jnp.zeros((g, F), out_dtype)
                continue
            # Sublane j of `rolled` is the right row circularly shifted by
            # d0 + j along the flat (row-aligned) pixel axis -> one XLU op
            # produces the whole group already in output layout.  Wrapped
            # elements only land on masked (w < d) columns, so the zero-filled
            # shifted difference of the PyTorch loop is reproduced exactly.
            rolled = pltpu.roll(rb, shift=d0, axis=1, stride=1, stride_axis=0)
            slab = jnp.where(w_minus_j >= d0, lb - rolled, 0)
            out_ref[0, c, d0:d0 + g, :] = slab[:g].astype(out_dtype)


def diff_volume(left_feature, right_feature, max_disp):
    """Pallas TPU implementation of DiffVolume.forward."""
    B, C, H, W = left_feature.shape
    D = int(max_disp)
    dtype = left_feature.dtype
    itemsize = jnp.dtype(dtype).itemsize
    # Disparities are produced in sublane groups that fill one packed vreg:
    # 8 for f32, 16 for bf16, 32 for int8/fp8.
    group = max(8, 32 // itemsize)

    vmem_cap = _vmem_capacity_bytes()
    min_row_tiles = 2 if B == 1 else 1  # keep both v7x TensorCores busy

    W_eff, pad = W, 0
    TH = _choose_row_tile(H, W, C, D, itemsize, vmem_cap, min_row_tiles)
    if TH is None:
        # No lane-aligned row tile fits: pad W up to a multiple of 128 so every
        # row tile is lane dense, and slice the padding off afterwards.
        W_eff = ((W + 127) // 128) * 128
        pad = W_eff - W
        TH = _choose_row_tile(H, W_eff, C, D, itemsize, vmem_cap, min_row_tiles)
        if TH is None:
            TH = 1  # TODO(synk): tile max_disp over the grid for extreme C*D*W.

    if pad:
        widths = ((0, 0), (0, 0), (0, 0), (0, pad))
        left_feature = jnp.pad(left_feature, widths)
        right_feature = jnp.pad(right_feature, widths)

    F = TH * W_eff
    n_h = H // TH

    # Free reshape: collapsing the contiguous (H, W) pair keeps blocks lane dense.
    left_flat = left_feature.reshape(B, C, H * W_eff)
    right_flat = right_feature.reshape(B, C, H * W_eff)

    pipeline_bytes = 2 * (2 * C * F + C * D * F) * itemsize
    vmem_limit = int(min(0.75 * vmem_cap, max(16 << 20, 2 * pipeline_bytes)))

    kernel = functools.partial(_diff_volume_kernel, width=W_eff, num_disp=D,
                               group=group)

    out_flat = pl.pallas_call(
        kernel,
        out_shape=jax.ShapeDtypeStruct((B, C, D, H * W_eff), dtype),
        grid=(B, n_h),
        in_specs=[
            pl.BlockSpec((1, C, F), lambda b, h: (b, 0, h)),
            pl.BlockSpec((1, C, F), lambda b, h: (b, 0, h)),
        ],
        out_specs=pl.BlockSpec((1, C, D, F), lambda b, h: (b, 0, 0, h)),
        compiler_params=pltpu.CompilerParams(
            dimension_semantics=("parallel", "parallel"),
            vmem_limit_bytes=vmem_limit,
        ),
    )(left_flat, right_flat)

    out = out_flat.reshape(B, C, D, H, W_eff)
    if pad:
        out = out[..., :W]  # awkward-W fallback only; one extra copy
    return out


def _reference(left, right, max_disp):
    """Pure-JAX reference of the PyTorch DiffVolume forward."""
    W = left.shape[-1]
    w_idx = jnp.arange(W)
    slabs = []
    for i in range(max_disp):
        shifted = jnp.roll(right, shift=i, axis=3)
        mask = (w_idx >= i)[None, None, None, :]
        slabs.append(jnp.where(mask, left - shifted, jnp.zeros_like(left)))
    return jnp.stack(slabs, axis=2)  # (B, C, D, H, W)


if __name__ == "__main__":
    key = jax.random.PRNGKey(0)
    k1, k2, k3, k4 = jax.random.split(key, 4)

    # Main case: lane-aligned row tiles, full disparity groups.
    B, C, H, W, D = 2, 4, 16, 16, 8
    left = jax.random.normal(k1, (B, C, H, W), dtype=jnp.float32)
    right = jax.random.normal(k2, (B, C, H, W), dtype=jnp.float32)
    out = jax.block_until_ready(diff_volume(left, right, D))
    ref = jax.block_until_ready(_reference(left, right, D))
    np.testing.assert_allclose(np.asarray(out), np.asarray(ref), rtol=1e-6, atol=1e-6)
    assert out.shape == (B, C, D, H, W)

    # Robustness case: awkward W (pad-to-128 fallback), batch of 1 (megacore row
    # split), and a ragged tail disparity group.
    B2, C2, H2, W2, D2 = 1, 2, 16, 20, 11
    left2 = jax.random.normal(k3, (B2, C2, H2, W2), dtype=jnp.float32)
    right2 = jax.random.normal(k4, (B2, C2, H2, W2), dtype=jnp.float32)
    out2 = jax.block_until_ready(diff_volume(left2, right2, D2))
    ref2 = jax.block_until_ready(_reference(left2, right2, D2))
    np.testing.assert_allclose(np.asarray(out2), np.asarray(ref2), rtol=1e-6, atol=1e-6)
    assert out2.shape == (B2, C2, D2, H2, W2)

    print("KERNEL_OK")
</pallas_src>

<mosaic_0001>
module attributes {stable_mosaic.version = 11 : i64} {
  func.func @_diff_volume_kernel(%arg0: i32, %arg1: i32, %arg2: memref<1x4x256xf32, #tpu.memory_space<vmem>>, %arg3: memref<1x4x256xf32, #tpu.memory_space<vmem>>, %arg4: memref<1x4x8x256xf32, #tpu.memory_space<vmem>>) attributes {dimension_semantics = [#tpu.dimension_semantics<parallel>, #tpu.dimension_semantics<parallel>], iteration_bounds = array<i64: 2, 1>, scalar_prefetch = 0 : i64, scratch_operands = 0 : i64, tpu.core_type = #tpu.core_type<tc>, window_params = [{transform_indices = @transform_0, window_bounds = array<i64: 1, 4, 256>}, {transform_indices = @transform_1, window_bounds = array<i64: 1, 4, 256>}, {transform_indices = @transform_2, window_bounds = array<i64: 1, 4, 8, 256>}]} {
    %0 = tpu.iota {dimensions = array<i32: 1>} : vector<8x256xi32>
    %1 = tpu.iota {dimensions = array<i32: 0>} : vector<8x256xi32>
    %c16_i32 = arith.constant 16 : i32
    %c0_i32 = arith.constant 0 : i32
    %2 = arith.cmpi eq, %c16_i32, %c0_i32 : i32
    %c1_i32 = arith.constant 1 : i32
    %3 = arith.select %2, %c1_i32, %c16_i32 : i32
    %4 = vector.broadcast %3 : i32 to vector<8x256xi32>
    %5 = arith.remsi %0, %4 : vector<8x256xi32>
    %c0_i32_0 = arith.constant 0 : i32
    %6 = vector.broadcast %c0_i32_0 : i32 to vector<8x256xi32>
    %7 = arith.cmpi ne, %5, %6 : vector<8x256xi32>
    %c0_i32_1 = arith.constant 0 : i32
    %8 = vector.broadcast %c0_i32_1 : i32 to vector<8x256xi32>
    %9 = arith.cmpi slt, %5, %8 : vector<8x256xi32>
    %c0_i32_2 = arith.constant 0 : i32
    %10 = arith.cmpi slt, %3, %c0_i32_2 : i32
    %11 = vector.broadcast %10 : i1 to vector<8x256xi1>
    %12 = vector.broadcast %11 : vector<8x256xi1> to vector<8x256xi1>
    %13 = arith.xori %9, %12 : vector<8x256xi1>
    %14 = arith.andi %13, %7 : vector<8x256xi1>
    %15 = vector.broadcast %3 : i32 to vector<8x256xi32>
    %16 = arith.addi %5, %15 : vector<8x256xi32>
    %17 = arith.select %14, %16, %5 : vector<8x256xi1>, vector<8x256xi32>
    %18 = arith.subi %17, %1 : vector<8x256xi32>
    %c0 = arith.constant 0 : index
    %c0_3 = arith.constant 0 : index
    %c0_4 = arith.constant 0 : index
    %19 = vector.load %arg2[%c0, %c0_3, %c0_4] : memref<1x4x256xf32, #tpu.memory_space<vmem>>, vector<1x1x256xf32>
    %20 = vector.shape_cast %19 : vector<1x1x256xf32> to vector<1x256xf32>
    %21 = vector.shape_cast %20 : vector<1x256xf32> to vector<1x256xf32>
    %22 = vector.broadcast %21 : vector<1x256xf32> to vector<8x256xf32>
    %c0_5 = arith.constant 0 : index
    %c0_6 = arith.constant 0 : index
    %c0_7 = arith.constant 0 : index
    %23 = vector.load %arg3[%c0_5, %c0_6, %c0_7] : memref<1x4x256xf32, #tpu.memory_space<vmem>>, vector<1x1x256xf32>
    %24 = vector.shape_cast %23 : vector<1x1x256xf32> to vector<1x256xf32>
    %25 = vector.shape_cast %24 : vector<1x256xf32> to vector<1x256xf32>
    %26 = vector.broadcast %25 : vector<1x256xf32> to vector<8x256xf32>
    %c0_i32_8 = arith.constant 0 : i32
    %27 = tpu.dynamic_rotate %26 by %c0_i32_8 dim 1 {stride = 1 : si32, stride_dimension = 0 : si32} : vector<8x256xf32>, i32 -> vector<8x256xf32>
    %c0_i32_9 = arith.constant 0 : i32
    %28 = vector.broadcast %c0_i32_9 : i32 to vector<8x256xi32>
    %29 = arith.cmpi sge, %18, %28 : vector<8x256xi32>
    %30 = arith.subf %22, %27 : vector<8x256xf32>
    %c0_i32_10 = arith.constant 0 : i32
    %31 = arith.sitofp %c0_i32_10 : i32 to f32
    %32 = vector.broadcast %31 : f32 to vector<8x256xf32>
    %33 = arith.select %29, %30, %32 : vector<8x256xi1>, vector<8x256xf32>
    %c0_11 = arith.constant 0 : index
    %c0_12 = arith.constant 0 : index
    %c0_13 = arith.constant 0 : index
    %c0_14 = arith.constant 0 : index
    %34 = vector.load %arg4[%c0_11, %c0_12, %c0_13, %c0_14] : memref<1x4x8x256xf32, #tpu.memory_space<vmem>>, vector<1x1x8x256xf32>
    %35 = vector.shape_cast %34 : vector<1x1x8x256xf32> to vector<8x256xf32>
    %36 = vector.shape_cast %33 : vector<8x256xf32> to vector<1x1x8x256xf32>
    tpu.vector_store %arg4[%c0_11, %c0_12, %c0_13, %c0_14], %36 {strides = array<i32>} : memref<1x4x8x256xf32, #tpu.memory_space<vmem>>, vector<1x1x8x256xf32>,
    %c0_15 = arith.constant 0 : index
    %c1 = arith.constant 1 : index
    %c0_16 = arith.constant 0 : index
    %37 = vector.load %arg2[%c0_15, %c1, %c0_16] : memref<1x4x256xf32, #tpu.memory_space<vmem>>, vector<1x1x256xf32>
    %38 = vector.shape_cast %37 : vector<1x1x256xf32> to vector<1x256xf32>
    %39 = vector.shape_cast %38 : vector<1x256xf32> to vector<1x256xf32>
    %40 = vector.broadcast %39 : vector<1x256xf32> to vector<8x256xf32>
    %c0_17 = arith.constant 0 : index
    %c1_18 = arith.constant 1 : index
    %c0_19 = arith.constant 0 : index
    %41 = vector.load %arg3[%c0_17, %c1_18, %c0_19] : memref<1x4x256xf32, #tpu.memory_space<vmem>>, vector<1x1x256xf32>
    %42 = vector.shape_cast %41 : vector<1x1x256xf32> to vector<1x256xf32>
    %43 = vector.shape_cast %42 : vector<1x256xf32> to vector<1x256xf32>
    %44 = vector.broadcast %43 : vector<1x256xf32> to vector<8x256xf32>
    %c0_i32_20 = arith.constant 0 : i32
    %45 = tpu.dynamic_rotate %44 by %c0_i32_20 dim 1 {stride = 1 : si32, stride_dimension = 0 : si32} : vector<8x256xf32>, i32 -> vector<8x256xf32>
    %c0_i32_21 = arith.constant 0 : i32
    %46 = vector.broadcast %c0_i32_21 : i32 to vector<8x256xi32>
    %47 = arith.cmpi sge, %18, %46 : vector<8x256xi32>
    %48 = arith.subf %40, %45 : vector<8x256xf32>
    %c0_i32_22 = arith.constant 0 : i32
    %49 = arith.sitofp %c0_i32_22 : i32 to f32
    %50 = vector.broadcast %49 : f32 to vector<8x256xf32>
    %51 = arith.select %47, %48, %50 : vector<8x256xi1>, vector<8x256xf32>
    %c0_23 = arith.constant 0 : index
    %c1_24 = arith.constant 1 : index
    %c0_25 = arith.constant 0 : index
    %c0_26 = arith.constant 0 : index
    %52 = vector.load %arg4[%c0_23, %c1_24, %c0_25, %c0_26] : memref<1x4x8x256xf32, #tpu.memory_space<vmem>>, vector<1x1x8x256xf32>
    %53 = vector.shape_cast %52 : vector<1x1x8x256xf32> to vector<8x256xf32>
    %54 = vector.shape_cast %51 : vector<8x256xf32> to vector<1x1x8x256xf32>
    tpu.vector_store %arg4[%c0_23, %c1_24, %c0_25, %c0_26], %54 {strides = array<i32>} : memref<1x4x8x256xf32, #tpu.memory_space<vmem>>, vector<1x1x8x256xf32>,
    %c0_27 = arith.constant 0 : index
    %c2 = arith.constant 2 : index
    %c0_28 = arith.constant 0 : index
    %55 = vector.load %arg2[%c0_27, %c2, %c0_28] : memref<1x4x256xf32, #tpu.memory_space<vmem>>, vector<1x1x256xf32>
    %56 = vector.shape_cast %55 : vector<1x1x256xf32> to vector<1x256xf32>
    %57 = vector.shape_cast %56 : vector<1x256xf32> to vector<1x256xf32>
    %58 = vector.broadcast %57 : vector<1x256xf32> to vector<8x256xf32>
    %c0_29 = arith.constant 0 : index
    %c2_30 = arith.constant 2 : index
    %c0_31 = arith.constant 0 : index
    %59 = vector.load %arg3[%c0_29, %c2_30, %c0_31] : memref<1x4x256xf32, #tpu.memory_space<vmem>>, vector<1x1x256xf32>
    %60 = vector.shape_cast %59 : vector<1x1x256xf32> to vector<1x256xf32>
    %61 = vector.shape_cast %60 : vector<1x256xf32> to vector<1x256xf32>
    %62 = vector.broadcast %61 : vector<1x256xf32> to vector<8x256xf32>
    %c0_i32_32 = arith.constant 0 : i32
    %63 = tpu.dynamic_rotate %62 by %c0_i32_32 dim 1 {stride = 1 : si32, stride_dimension = 0 : si32} : vector<8x256xf32>, i32 -> vector<8x256xf32>
    %c0_i32_33 = arith.constant 0 : i32
    %64 = vector.broadcast %c0_i32_33 : i32 to vector<8x256xi32>
    %65 = arith.cmpi sge, %18, %64 : vector<8x256xi32>
    %66 = arith.subf %58, %63 : vector<8x256xf32>
    %c0_i32_34 = arith.constant 0 : i32
    %67 = arith.sitofp %c0_i32_34 : i32 to f32
    %68 = vector.broadcast %67 : f32 to vector<8x256xf32>
    %69 = arith.select %65, %66, %68 : vector<8x256xi1>, vector<8x256xf32>
    %c0_35 = arith.constant 0 : index
    %c2_36 = arith.constant 2 : index
    %c0_37 = arith.constant 0 : index
    %c0_38 = arith.constant 0 : index
    %70 = vector.load %arg4[%c0_35, %c2_36, %c0_37, %c0_38] : memref<1x4x8x256xf32, #tpu.memory_space<vmem>>, vector<1x1x8x256xf32>
    %71 = vector.shape_cast %70 : vector<1x1x8x256xf32> to vector<8x256xf32>
    %72 = vector.shape_cast %69 : vector<8x256xf32> to vector<1x1x8x256xf32>
    tpu.vector_store %arg4[%c0_35, %c2_36, %c0_37, %c0_38], %72 {strides = array<i32>} : memref<1x4x8x256xf32, #tpu.memory_space<vmem>>, vector<1x1x8x256xf32>,
    %c0_39 = arith.constant 0 : index
    %c3 = arith.constant 3 : index
    %c0_40 = arith.constant 0 : index
    %73 = vector.load %arg2[%c0_39, %c3, %c0_40] : memref<1x4x256xf32, #tpu.memory_space<vmem>>, vector<1x1x256xf32>
    %74 = vector.shape_cast %73 : vector<1x1x256xf32> to vector<1x256xf32>
    %75 = vector.shape_cast %74 : vector<1x256xf32> to vector<1x256xf32>
    %76 = vector.broadcast %75 : vector<1x256xf32> to vector<8x256xf32>
    %c0_41 = arith.constant 0 : index
    %c3_42 = arith.constant 3 : index
    %c0_43 = arith.constant 0 : index
    %77 = vector.load %arg3[%c0_41, %c3_42, %c0_43] : memref<1x4x256xf32, #tpu.memory_space<vmem>>, vector<1x1x256xf32>
    %78 = vector.shape_cast %77 : vector<1x1x256xf32> to vector<1x256xf32>
    %79 = vector.shape_cast %78 : vector<1x256xf32> to vector<1x256xf32>
    %80 = vector.broadcast %79 : vector<1x256xf32> to vector<8x256xf32>
    %c0_i32_44 = arith.constant 0 : i32
    %81 = tpu.dynamic_rotate %80 by %c0_i32_44 dim 1 {stride = 1 : si32, stride_dimension = 0 : si32} : vector<8x256xf32>, i32 -> vector<8x256xf32>
    %c0_i32_45 = arith.constant 0 : i32
    %82 = vector.broadcast %c0_i32_45 : i32 to vector<8x256xi32>
    %83 = arith.cmpi sge, %18, %82 : vector<8x256xi32>
    %84 = arith.subf %76, %81 : vector<8x256xf32>
    %c0_i32_46 = arith.constant 0 : i32
    %85 = arith.sitofp %c0_i32_46 : i32 to f32
    %86 = vector.broadcast %85 : f32 to vector<8x256xf32>
    %87 = arith.select %83, %84, %86 : vector<8x256xi1>, vector<8x256xf32>
    %c0_47 = arith.constant 0 : index
    %c3_48 = arith.constant 3 : index
    %c0_49 = arith.constant 0 : index
    %c0_50 = arith.constant 0 : index
    %88 = vector.load %arg4[%c0_47, %c3_48, %c0_49, %c0_50] : memref<1x4x8x256xf32, #tpu.memory_space<vmem>>, vector<1x1x8x256xf32>
    %89 = vector.shape_cast %88 : vector<1x1x8x256xf32> to vector<8x256xf32>
    %90 = vector.shape_cast %87 : vector<8x256xf32> to vector<1x1x8x256xf32>
    tpu.vector_store %arg4[%c0_47, %c3_48, %c0_49, %c0_50], %90 {strides = array<i32>} : memref<1x4x8x256xf32, #tpu.memory_space<vmem>>, vector<1x1x8x256xf32>,
    return
  }
  func.func @transform_0(%arg0: i32, %arg1: i32) -> (i32, i32, i32) {
    %c0_i32 = arith.constant 0 : i32
    %c0_i32_0 = arith.constant 0 : i32
    return %arg0, %c0_i32, %arg1 : i32, i32, i32
  }
  func.func @transform_1(%arg0: i32, %arg1: i32) -> (i32, i32, i32) {
    %c0_i32 = arith.constant 0 : i32
    %c0_i32_0 = arith.constant 0 : i32
    return %arg0, %c0_i32, %arg1 : i32, i32, i32
  }
  func.func @transform_2(%arg0: i32, %arg1: i32) -> (i32, i32, i32, i32) {
    %c0_i32 = arith.constant 0 : i32
    %c0_i32_0 = arith.constant 0 : i32
    %c0_i32_1 = arith.constant 0 : i32
    return %arg0, %c0_i32, %c0_i32_0, %arg1 : i32, i32, i32, i32
  }
}

</mosaic_0001>

<llo_original>
// kernel: tpu_custom_call.1
$region0: #{tpu_custom_call.1}
  #allocation0 [shape = 'u32[]', space=smem, size = 0x4, offset = 0x4, fixed_abs, tag = 'smem constant byte address 0x4 - core index']
  #allocation1 [shape = 'u32[144,128]{1,0:T(1,128)}', space=vmem, size = 0x12000, scoped, tag = 'internal scratch']
  %s0 = inlined_call_operand.hbm [shape: f32[2,4,256], index: 0, kind: input, shape index: {}]
  %s1 = inlined_call_operand.hbm [shape: f32[2,4,256], index: 1, kind: input, shape index: {}]
  %s2 = inlined_call_operand.hbm [shape: f32[2,4,8,256], index: 2, kind: output, shape index: {}]
  %s3 = sld [smem:[#allocation0]]
  $region49: #{tpu_custom_call.1} parent=0
    _
  %s5 = ssub.s32 1, %s3
  %s6 = scalar_select 0, %s5, %s3
  $region1: #{tpu_custom_call.1} parent=0
    #allocation2 [shape = 'u8[8192]{0}', space=vmem, size = 0x2000, scoped, tag = 'input window, operand 0']
    #allocation3 [shape = 's32[2]{0}', space=sflag, size = 0x8, scoped, tag = 'scoped memory for tpu_custom_call.1']
    #allocation4 [shape = 's32[2]{0}', space=sflag, size = 0x8, scoped, tag = 'scoped memory for tpu_custom_call.1']
    #allocation5 [shape = 'u8[8192]{0}', space=vmem, size = 0x2000, scoped, tag = 'input window, operand 1']
    #allocation6 [shape = 's32[2]{0}', space=sflag, size = 0x8, scoped, tag = 'scoped memory for tpu_custom_call.1']
    #allocation7 [shape = 'u8[65536]{0}', space=vmem, size = 0x10000, scoped, tag = 'output window, operand 0']
    %7 = vsyncpa [#allocation3], 0
    %s8 = scalar_lea.sflag [#allocation3], 1
    %9 = vsyncpa %s8, 0
    %10 = vsyncpa [#allocation6], 0
    %s11 = scalar_lea.sflag [#allocation6], 1
    %12 = vsyncpa %s11, 0
    %13 = vsyncpa [#allocation4], 0
    %s14 = scalar_lea.sflag [#allocation4], 1
    %15 = vsyncpa %s14, 0
    loop: start=0, step=1, limit=4
    $region2: #{tpu_custom_call.1} parent=1 // loop_pre_header
      _
    $region3: #{tpu_custom_call.1} parent=1 // loop_header
      %s17 = sphi 0, %s21
      %p18 = scmp.ge.s32.totalorder %s17, 4
      %s24 = sphi 0, %s36
      %s25 = sphi 0, %s32
      %s26 = sphi 0, %s24
      %s27 = sphi 0, %s25
      %s28 = sphi 0, %s26
      %s29 = sphi 0, %s27
      %s41 = sphi 0, %s43
      %s44 = sphi 0, %s41
      %s45 = sphi 0, %s44
      %s61 = sphi 0, %s45
      %s69 = sphi 0, %s71
      %s72 = sphi 0, %s69
      %s73 = sphi 0, %s72
      %s89 = sphi 0, %s73
      %s97 = sphi 0, %s99
      %s100 = sphi 0, %s97
      %s101 = sphi 0, %s100
      %s117 = sphi 0, %s101
    $region4: #{tpu_custom_call.1} parent=1 // loop_header_branch
      %20 = sbr.rel (%p18) target = $region8
    $region5: #{tpu_custom_call.1} parent=1 // loop_body
      %s22 = ssub.s32 %s17, 1
      %s23 = ssub.s32 %s17, 2
      %s30 = sadd.s32 1, %s25
      %p31 = scmp.ge.s32.totalorder %s30, 1
      %s32 = scalar_select %p31, 0, %s30
      %s33 = sadd.s32 1, %s24
      %s34 = scalar_select %p31, %s33, %s24
      %p35 = scmp.ge.s32.totalorder %s34, 2
      %s36 = scalar_select %p35, 0, %s34
      %s37 = ssub.s32 %s24, %s36
      %s38 = ssub.s32 %s25, %s32
      %s39 = sor.u32 %s37, %s38
      %p40 = scmp.eq.s32.totalorder %s39, 0
      %s42 = sadd.s32 %s41, 1
      %s43 = scalar_select %p40, %s41, %s42
      %p46 = pneg %p40
      %p47 = scmp.eq.s32.totalorder %s17, 1
      %p48 = por %p46, %p47
      %p49 = scmp.ne.s32.totalorder %s41, %s44
      %p50 = scmp.eq.s32.totalorder %s17, 0
      %p51 = por %p49, %p50
      %p52 = scmp.ne.s32.totalorder %s41, %s44
      %p53 = scmp.eq.s32.totalorder %s22, 1
      %p54 = por %p52, %p53
      %p55 = scmp.ne.s32.totalorder %s44, %s45
      %p56 = scmp.eq.s32.totalorder %s22, 0
      %p57 = por %p55, %p56
      %p58 = scmp.ne.s32.totalorder %s44, %s45
      %p59 = scmp.eq.s32.totalorder %s23, 1
      %p60 = por %p58, %p59
      %p62 = scmp.ne.s32.totalorder %s45, %s61
      %p63 = scmp.eq.s32.totalorder %s23, 0
      %p64 = por %p62, %p63
      %s65 = ssub.s32 %s24, %s36
      %s66 = ssub.s32 %s25, %s32
      %s67 = sor.u32 %s65, %s66
      %p68 = scmp.eq.s32.totalorder %s67, 0
      %s70 = sadd.s32 %s69, 1
      %s71 = scalar_select %p68, %s69, %s70
      %p74 = pneg %p68
      %p75 = scmp.eq.s32.totalorder %s17, 1
      %p76 = por %p74, %p75
      %p77 = scmp.ne.s32.totalorder %s69, %s72
      %p78 = scmp.eq.s32.totalorder %s17, 0
      %p79 = por %p77, %p78
      %p80 = scmp.ne.s32.totalorder %s69, %s72
      %p81 = scmp.eq.s32.totalorder %s22, 1
      %p82 = por %p80, %p81
      %p83 = scmp.ne.s32.totalorder %s72, %s73
      %p84 = scmp.eq.s32.totalorder %s22, 0
      %p85 = por %p83, %p84
      %p86 = scmp.ne.s32.totalorder %s72, %s73
      %p87 = scmp.eq.s32.totalorder %s23, 1
      %p88 = por %p86, %p87
      %p90 = scmp.ne.s32.totalorder %s73, %s89
      %p91 = scmp.eq.s32.totalorder %s23, 0
      %p92 = por %p90, %p91
      %s93 = ssub.s32 %s24, %s36
      %s94 = ssub.s32 %s25, %s32
      %s95 = sor.u32 %s93, %s94
      %p96 = scmp.eq.s32.totalorder %s95, 0
      %s98 = sadd.s32 %s97, 1
      %s99 = scalar_select %p96, %s97, %s98
      %p102 = pneg %p96
      %p103 = scmp.eq.s32.totalorder %s17, 1
      %p104 = por %p102, %p103
      %p105 = scmp.ne.s32.totalorder %s97, %s100
      %p106 = scmp.eq.s32.totalorder %s17, 0
      %p107 = por %p105, %p106
      %p108 = scmp.ne.s32.totalorder %s97, %s100
      %p109 = scmp.eq.s32.totalorder %s22, 1
      %p110 = por %p108, %p109
      %p111 = scmp.ne.s32.totalorder %s100, %s101
      %p112 = scmp.eq.s32.totalorder %s22, 0
      %p113 = por %p111, %p112
      %p114 = scmp.ne.s32.totalorder %s100, %s101
      %p115 = scmp.eq.s32.totalorder %s23, 1
      %p116 = por %p114, %p115
      %p118 = scmp.ne.s32.totalorder %s101, %s117
      %p119 = scmp.eq.s32.totalorder %s23, 0
      %p120 = por %p118, %p119
      %p121 = scmp.le.s32.totalorder 1, %s17
      %p122 = scmp.lt.s32.totalorder %s17, 3
      %p123 = pnand %p121, %p122
      %p124 = pneg %p123
      // Predicated region
      $region9: #{tpu_custom_call.1} parent=5 // pred_check
        _
      $region10: #{tpu_custom_call.1} parent=5 // pred_check_branch
        %126 = sbr.rel (%p123) target = $region12
      $region11: #{tpu_custom_call.1} parent=5 // pred_region
        %s127 = ssub.s32 %s17, 1
      $region12: #{tpu_custom_call.1} parent=5 // pred_fallthru
        _
      %p128 = scmp.lt.s32.totalorder %s17, 2
      // Predicated region
      $region13: #{tpu_custom_call.1} parent=5 // pred_check
        %p129 = pneg %p128
      $region14: #{tpu_custom_call.1} parent=5 // pred_check_branch
        %131 = sbr.rel (%p129) target = $region16
      $region15: #{tpu_custom_call.1} parent=5 // pred_region
        // Predicated region
        $region17: #{tpu_custom_call.1} parent=15 // pred_check
          %p132 = pneg %p51
        $region18: #{tpu_custom_call.1} parent=15 // pred_check_branch
          %134 = sbr.rel (%p132) target = $region20
        $region19: #{tpu_custom_call.1} parent=15 // pred_region
          %s135 = sand.u32 %s41, 1
          %s136 = scalar_lea.sflag [#allocation3], %s135
          %s137 = sand.u32 %s41, 1
          %s138 = smul.addr %s137, 8
          %s139 = scalar_lea.vmem [#allocation2], %s138
          %s140 = smul.u32 2, %s25
          %s142 = ssub.s32 128, 128
          %143 = vsyncadd %s136, %s142
          %s144 = smul.addr %s24, 2
          %s145 = sadd.s32 %s140, %s144
          %s146 = smul.addr %s145, 64
          %s147 = scalar_lea.hbm %s0, %s146
          %s149 = sshll.u32 %s139, 4
          %s150 = int_to_ptr.vmem [resolvable:$true] %s149
          %152 = dma.hbm_to_vmem [thread:$0]  %s147, 128, %s150, %s136
        $region20: #{tpu_custom_call.1} parent=15 // pred_fallthru
          _
        // Predicated region
        $region21: #{tpu_custom_call.1} parent=15 // pred_check
          %p153 = pneg %p79
        $region22: #{tpu_custom_call.1} parent=15 // pred_check_branch
          %155 = sbr.rel (%p153) target = $region24
        $region23: #{tpu_custom_call.1} parent=15 // pred_region
          %s156 = sand.u32 %s69, 1
          %s157 = scalar_lea.sflag [#allocation6], %s156
          %s158 = sand.u32 %s69, 1
          %s159 = smul.addr %s158, 8
          %s160 = scalar_lea.vmem [#allocation5], %s159
          %s161 = smul.u32 2, %s25
          %s163 = ssub.s32 128, 128
          %164 = vsyncadd %s157, %s163
          %s165 = smul.addr %s24, 2
          %s166 = sadd.s32 %s161, %s165
          %s167 = smul.addr %s166, 64
          %s168 = scalar_lea.hbm %s1, %s167
          %s170 = sshll.u32 %s160, 4
          %s171 = int_to_ptr.vmem [resolvable:$true] %s170
          %173 = dma.hbm_to_vmem [thread:$0]  %s168, 128, %s171, %s157
        $region24: #{tpu_custom_call.1} parent=15 // pred_fallthru
          _
      $region16: #{tpu_custom_call.1} parent=5 // pred_fallthru
        _
      %p174 = scmp.le.s32.totalorder 1, %s17
      %p175 = scmp.lt.s32.totalorder %s17, 3
      %p176 = pnand %p174, %p175
      %p177 = pneg %p176
      // Predicated region
      $region25: #{tpu_custom_call.1} parent=5 // pred_check
        _
      $region26: #{tpu_custom_call.1} parent=5 // pred_check_branch
        %179 = sbr.rel (%p176) target = $region28
      $region27: #{tpu_custom_call.1} parent=5 // pred_region
        %s180 = ssub.s32 %s17, 1
        %s181 = sand.u32 %s44, 1
        %s182 = scalar_lea.sflag [#allocation3], %s181
        %s183 = sand.u32 %s44, 1
        %s184 = smul.addr %s183, 8
        %s185 = scalar_lea.vmem [#allocation2], %s184
        // Predicated region
        $region29: #{tpu_custom_call.1} parent=27 // pred_check
          %p186 = pneg %p57
        $region30: #{tpu_custom_call.1} parent=27 // pred_check_branch
          %188 = sbr.rel (%p186) target = $region32
        $region31: #{tpu_custom_call.1} parent=27 // pred_region
          %189 = dma.done %s182, 128
        $region32: #{tpu_custom_call.1} parent=27 // pred_fallthru
          _
        %s190 = sand.u32 %s72, 1
        %s191 = scalar_lea.sflag [#allocation6], %s190
        %s192 = sand.u32 %s72, 1
        %s193 = smul.addr %s192, 8
        %s194 = scalar_lea.vmem [#allocation5], %s193
        // Predicated region
        $region33: #{tpu_custom_call.1} parent=27 // pred_check
          %p195 = pneg %p85
        $region34: #{tpu_custom_call.1} parent=27 // pred_check_branch
          %197 = sbr.rel (%p195) target = $region36
        $region35: #{tpu_custom_call.1} parent=27 // pred_region
          %198 = dma.done %s191, 128
        $region36: #{tpu_custom_call.1} parent=27 // pred_fallthru
          _
        %s199 = sand.u32 %s44, 1
        %s200 = scalar_lea.sflag [#allocation3], %s199
        %s201 = sand.u32 %s44, 1
        %s202 = smul.addr %s201, 8
        %s203 = scalar_lea.vmem [#allocation2], %s202
        %p204 = pneg %p57
        %p205 = pneg %p54
        %s206 = sand.u32 %s72, 1
        %s207 = scalar_lea.sflag [#allocation6], %s206
        %s208 = sand.u32 %s72, 1
        %s209 = smul.addr %s208, 8
        %s210 = scalar_lea.vmem [#allocation5], %s209
        %p211 = pneg %p85
        %p212 = pneg %p82
        %p213 = pneg %p113
        %p214 = pneg %p110
        %s215 = sand.u32 %s100, 1
        %s216 = scalar_lea.sflag [#allocation4], %s215
        %s217 = sand.u32 %s100, 1
        %s218 = smul.addr %s217, 64
        %s219 = scalar_lea.vmem [#allocation7], %s218
        %s220 = smul.u32 2, %s27
        %s221 = smul.u32 2, %s27
        %s222 = smul.u32 2, %s27
        %v223 = vlaneseq
        %v224 = vand.u32 %v223, 127
        %v225 = vadd.s32 %v224, 128
        %v226 = vlaneseq
        %v227 = vshrl.u32 %v226, 7
        %vm228 = vcmp.lt.s32.totalorder %v224, 0
        %v229 = vsub.s32 0, %v224
        %v230 = vsel %vm228, %v229, %v224
        %v231 = vshrl.u32 %v230, 4
        %v232 = vand.u32 %v230, 15
        %v233 = vsub.s32 0, %v232
        %v234 = vsel %vm228, %v233, %v232
        %vm235 = vcmp.lt.s32.totalorder %v225, 0
        %v236 = vsub.s32 0, %v225
        %v237 = vsel %vm235, %v236, %v225
        %v238 = vshrl.u32 %v237, 4
        %v239 = vand.u32 %v237, 15
        %v240 = vsub.s32 0, %v239
        %v241 = vsel %vm235, %v240, %v239
        %vm242 = vcmp.ne.s32.totalorder %v234, 0
        %vm243 = vcmp.ne.s32.totalorder %v241, 0
        %vm244 = vcmp.lt.s32.totalorder %v234, 0
        %vm245 = vcmp.lt.s32.totalorder %v241, 0
        %vm246 = vmand %vm244, %vm242
        %vm247 = vmand %vm245, %vm243
        %v248 = vadd.s32 %v234, 16
        %v249 = vadd.s32 %v241, 16
        %v250 = vsel %vm246, %v248, %v234
        %v251 = vsel %vm247, %v249, %v241
        %v252 = vsub.s32 %v250, %v227
        %v253 = vsub.s32 %v251, %v227
        %v254 = vld [vmem:[%s185] ss:$4 sm:$0x3]
        %v256 = vlaneseq
        %v257 = vshrl.u32 %v256, 7
        %v258 = vsub.s32 0, %v257
        %v259 = vrot.slane %v254, %v258
        %v260 = vlaneseq
        %v261 = vshrl.u32 %v260, 7
        %v262 = vsub.s32 1, %v261
        %v263 = vrot.slane %v254, %v262
        %v266 = vld [vmem:[%s194] ss:$4 sm:$0x3]
        %v268 = vlaneseq
        %v269 = vshrl.u32 %v268, 7
        %v270 = vsub.s32 0, %v269
        %v271 = vrot.slane %v266, %v270
        %v272 = vlaneseq
        %v273 = vshrl.u32 %v272, 7
        %v274 = vsub.s32 1, %v273
        %v275 = vrot.slane %v266, %v274
        %279 = vrot.lane.b32.xlu0 %v271, 256
        %v280 = vpop.permute.xlu0 %279
        %282 = vrot.lane.b32.xlu0 %v275, 256
        %v283 = vpop.permute.xlu0 %282
        %vm284 = vcmp.lt.s32.totalorder %v224, %v227
        %v285 = vsel %vm284, %v280, %v283
        %v286 = vsel %vm284, %v283, %v280
        %vm287 = vcmp.ge.s32.totalorder %v252, 0
        %vm288 = vcmp.ge.s32.totalorder %v253, 0
        %v289 = vsub.f32 %v259, %v286
        %v290 = vsub.f32 %v263, %v285
        %v291 = vsel %vm287, %v289, 0.0
        %v292 = vsel %vm288, %v290, 0.0
        %293 = vst [vmem:[%s219] sm:$0xff] %v291
        %294 = vst [vmem:[%s219 + $0x8] sm:$0xff] %v292
        %s295 = scalar_lea.vmem %s185, 1 [#allocation2]
        %v296 = vld [vmem:[%s295] ss:$4 sm:$0x3]
        %v298 = vlaneseq
        %v299 = vshrl.u32 %v298, 7
        %v300 = vsub.s32 0, %v299
        %v301 = vrot.slane %v296, %v300
        %v302 = vlaneseq
        %v303 = vshrl.u32 %v302, 7
        %v304 = vsub.s32 1, %v303
        %v305 = vrot.slane %v296, %v304
        %s308 = scalar_lea.vmem %s194, 1 [#allocation5]
        %v309 = vld [vmem:[%s308] ss:$4 sm:$0x3]
        %v311 = vlaneseq
        %v312 = vshrl.u32 %v311, 7
        %v313 = vsub.s32 0, %v312
        %v314 = vrot.slane %v309, %v313
        %v315 = vlaneseq
        %v316 = vshrl.u32 %v315, 7
        %v317 = vsub.s32 1, %v316
        %v318 = vrot.slane %v309, %v317
        %322 = vrot.lane.b32.xlu0 %v314, 256
        %v323 = vpop.permute.xlu0 %322
        %325 = vrot.lane.b32.xlu0 %v318, 256
        %v326 = vpop.permute.xlu0 %325
        %v327 = vsel %vm284, %v323, %v326
        %v328 = vsel %vm284, %v326, %v323
        %v329 = vsub.f32 %v301, %v328
        %v330 = vsub.f32 %v305, %v327
        %v331 = vsel %vm287, %v329, 0.0
        %v332 = vsel %vm288, %v330, 0.0
        %s333 = scalar_lea.vmem %s219, 16 [#allocation7]
        %334 = vst [vmem:[%s333] sm:$0xff] %v331
        %335 = vst [vmem:[%s333 + $0x8] sm:$0xff] %v332
        %s336 = scalar_lea.vmem %s185, 2 [#allocation2]
        %v337 = vld [vmem:[%s336] ss:$4 sm:$0x3]
        %v339 = vlaneseq
        %v340 = vshrl.u32 %v339, 7
        %v341 = vsub.s32 0, %v340
        %v342 = vrot.slane %v337, %v341
        %v343 = vlaneseq
        %v344 = vshrl.u32 %v343, 7
        %v345 = vsub.s32 1, %v344
        %v346 = vrot.slane %v337, %v345
        %s349 = scalar_lea.vmem %s194, 2 [#allocation5]
        %v350 = vld [vmem:[%s349] ss:$4 sm:$0x3]
        %v352 = vlaneseq
        %v353 = vshrl.u32 %v352, 7
        %v354 = vsub.s32 0, %v353
        %v355 = vrot.slane %v350, %v354
        %v356 = vlaneseq
        %v357 = vshrl.u32 %v356, 7
        %v358 = vsub.s32 1, %v357
        %v359 = vrot.slane %v350, %v358
        %363 = vrot.lane.b32.xlu0 %v355, 256
        %v364 = vpop.permute.xlu0 %363
        %366 = vrot.lane.b32.xlu0 %v359, 256
        %v367 = vpop.permute.xlu0 %366
        %v368 = vsel %vm284, %v364, %v367
        %v369 = vsel %vm284, %v367, %v364
        %v370 = vsub.f32 %v342, %v369
        %v371 = vsub.f32 %v346, %v368
        %v372 = vsel %vm287, %v370, 0.0
        %v373 = vsel %vm288, %v371, 0.0
        %s374 = scalar_lea.vmem %s219, 32 [#allocation7]
        %375 = vst [vmem:[%s374] sm:$0xff] %v372
        %376 = vst [vmem:[%s374 + $0x8] sm:$0xff] %v373
        %s377 = scalar_lea.vmem %s185, 3 [#allocation2]
        %v378 = vld [vmem:[%s377] ss:$4 sm:$0x3]
        %v380 = vlaneseq
        %v381 = vshrl.u32 %v380, 7
        %v382 = vsub.s32 0, %v381
        %v383 = vrot.slane %v378, %v382
        %v384 = vlaneseq
        %v385 = vshrl.u32 %v384, 7
        %v386 = vsub.s32 1, %v385
        %v387 = vrot.slane %v378, %v386
        %s390 = scalar_lea.vmem %s194, 3 [#allocation5]
        %v391 = vld [vmem:[%s390] ss:$4 sm:$0x3]
        %v393 = vlaneseq
        %v394 = vshrl.u32 %v393, 7
        %v395 = vsub.s32 0, %v394
        %v396 = vrot.slane %v391, %v395
        %v397 = vlaneseq
        %v398 = vshrl.u32 %v397, 7
        %v399 = vsub.s32 1, %v398
        %v400 = vrot.slane %v391, %v399
        %404 = vrot.lane.b32.xlu0 %v396, 256
        %v405 = vpop.permute.xlu0 %404
        %407 = vrot.lane.b32.xlu0 %v400, 256
        %v408 = vpop.permute.xlu0 %407
        %v409 = vsel %vm284, %v405, %v408
        %v410 = vsel %vm284, %v408, %v405
        %v411 = vsub.f32 %v383, %v410
        %v412 = vsub.f32 %v387, %v409
        %v413 = vsel %vm287, %v411, 0.0
        %v414 = vsel %vm288, %v412, 0.0
        %s415 = scalar_lea.vmem %s219, 48 [#allocation7]
        %416 = vst [vmem:[%s415] sm:$0xff] %v413
        %417 = vst [vmem:[%s415 + $0x8] sm:$0xff] %v414
        %s418 = sand.u32 %s100, 1
        %s419 = scalar_lea.sflag [#allocation4], %s418
        %s420 = sand.u32 %s100, 1
        %s421 = smul.addr %s420, 64
        %s422 = scalar_lea.vmem [#allocation7], %s421
        // Predicated region
        $region37: #{tpu_custom_call.1} parent=27 // pred_check
          %p423 = pneg %p110
        $region38: #{tpu_custom_call.1} parent=27 // pred_check_branch
          %425 = sbr.rel (%p423) target = $region40
        $region39: #{tpu_custom_call.1} parent=27 // pred_region
          %s426 = smul.u32 2, %s27
          %s428 = ssub.s32 1024, 1024
          %429 = vsyncadd %s419, %s428
          %s430 = smul.addr %s26, 8
          %s431 = sadd.s32 %s426, %s430
          %s432 = smul.addr %s431, 128
          %s433 = scalar_lea.hbm %s2, %s432
          %s434 = sshll.u32 %s422, 4
          %s435 = int_to_ptr.vmem [resolvable:$true] %s434
          %440 = dma.vmem_to_hbm [thread:$0]  %s435, 1024, %s433, %s419, 256, 256, 16
        $region40: #{tpu_custom_call.1} parent=27 // pred_fallthru
          _
      $region28: #{tpu_custom_call.1} parent=5 // pred_fallthru
        _
      %p441 = scmp.le.s32.totalorder 2, %s17
      // Predicated region
      $region41: #{tpu_custom_call.1} parent=5 // pred_check
        %p442 = pneg %p441
      $region42: #{tpu_custom_call.1} parent=5 // pred_check_branch
        %444 = sbr.rel (%p442) target = $region44
      $region43: #{tpu_custom_call.1} parent=5 // pred_region
        %s445 = ssub.s32 %s17, 2
        // Predicated region
        $region45: #{tpu_custom_call.1} parent=43 // pred_check
          %p446 = pneg %p116
        $region46: #{tpu_custom_call.1} parent=43 // pred_check_branch
          %448 = sbr.rel (%p446) target = $region48
        $region47: #{tpu_custom_call.1} parent=43 // pred_region
          %s449 = sand.u32 %s101, 1
          %s450 = scalar_lea.sflag [#allocation4], %s449
          %s451 = sand.u32 %s101, 1
          %s452 = smul.addr %s451, 64
          %s453 = scalar_lea.vmem [#allocation7], %s452
          %454 = dma.done %s450, 1024
        $region48: #{tpu_custom_call.1} parent=43 // pred_fallthru
          _
      $region44: #{tpu_custom_call.1} parent=5 // pred_fallthru
        _
    $region6: #{tpu_custom_call.1} parent=1 // loop_footer
      %s21 = sadd.s32 1, %s17
    $region7: #{tpu_custom_call.1} parent=1 // loop_footer_branch
      %16 = sbr.rel target = $region3
    $region8: #{tpu_custom_call.1} parent=1 // loop_exit
      _
    %455 = vsyncpa [#allocation3], 1
    %s456 = scalar_lea.sflag [#allocation3], 1
    %457 = vsyncpa %s456, 1
    %458 = vsyncpa [#allocation6], 1
    %s459 = scalar_lea.sflag [#allocation6], 1
    %460 = vsyncpa %s459, 1
    %461 = vsyncpa [#allocation4], 1
    %s462 = scalar_lea.sflag [#allocation4], 1
    %463 = vsyncpa %s462, 1

</llo_original>
